<compile_context>
chip_gen: v7x
topology: tpu7x:2x2x1
jax: 0.10.0
libtpu: 0.0.40
codegen_flags: <defaults>
</compile_context>

<pallas_src>
import math

import jax
import jax.numpy as jnp
import numpy as np
from jax import lax
from jax.experimental import pallas as pl
from jax.experimental.pallas import tpu as pltpu

_UNROLL = 8     # delays processed per fori_loop step (static inner unroll)
_LANE = 128     # TPU lane width; H tiles are multiples of this (lane-dense stores)


def _round_up(a, b):
    return (a + b - 1) // b * b


# ----------------------------------------------------------------------------
# Causal long convolution + residual kernel
#   grid = (B, H_pad // block_h, T_pad // block_t)   (T-tile axis innermost)
#   x_hbm : (B, T_pad, H_pad) in HBM (pl.ANY)  -- manual DMA per (b, h) slab
#   k_hbm : (T_pad, H_pad)    in HBM (pl.ANY)  -- manual DMA per (b, h) slab
#   y_ref : (block_t, block_h) output tile i
#   xpad_ref : (block_t + T_pad, block_h) zero-front-padded x slab (x dtype)
#   kbuf_ref : (T_pad, block_h) f32 filter slab
# ----------------------------------------------------------------------------
def conv_kernel(x_hbm, k_hbm, y_ref, xpad_ref, kbuf_ref, dma_sem):
    b = pl.program_id(0)
    h = pl.program_id(1)
    i = pl.program_id(2)            # output T-tile index (innermost grid axis)
    TT, TH = y_ref.shape            # (block_t, block_h)
    T_pad = kbuf_ref.shape[0]
    h0 = pl.multiple_of(h * TH, _LANE)

    # Stage this (b, h) slab once per slab. i == 0 is the first tile of a slab
    # because the T-tile axis is innermost and "arbitrary"; every slab re-stages
    # fully, so it is safe under megacore partitioning of the b / h axes.
    @pl.when(i == 0)
    def _():
        # Rows [0, TT) are "negative time" -> zero; never touched by the DMAs.
        xpad_ref[pl.ds(0, TT), :] = jnp.zeros((TT, TH), dtype=xpad_ref.dtype)
        cx = pltpu.make_async_copy(
            x_hbm.at[b, pl.ds(0, T_pad), pl.ds(h0, TH)],
            xpad_ref.at[pl.ds(TT, T_pad)],
            dma_sem.at[0])
        ck = pltpu.make_async_copy(
            k_hbm.at[pl.ds(0, T_pad), pl.ds(h0, TH)],
            kbuf_ref,
            dma_sem.at[1])
        cx.start()
        ck.start()
        cx.wait()
        ck.wait()

    # xpad row of x[t] is t + TT, so the slice start for delay d is base - d.
    base = pl.multiple_of((i + 1) * TT, _UNROLL)

    # Residual term: out = x + causal_conv(x, k); accumulate in f32 vregs.
    acc0 = xpad_ref[pl.ds(base, TT), :].astype(jnp.float32)

    # Causal dynamic trip count: only delays d <= t_max = (i+1)*TT - 1 contribute.
    n_chunks = (i + 1) * (TT // _UNROLL)

    def chunk(c, acc):
        d0 = pl.multiple_of(c * _UNROLL, _UNROLL)
        k_rows = kbuf_ref[pl.ds(d0, _UNROLL), :]          # (8, TH) aligned f32 load
        for j in range(_UNROLL):                          # static 8-way unroll
            d = d0 + j
            src = xpad_ref[pl.ds(base - d, TT), :]        # x[t-d] rows, 0 where t<d
            kd = k_rows[j:j + 1, :]                       # (1, TH) row -> sublane bcast
            acc = acc + src.astype(jnp.float32) * kd
        return acc

    acc = lax.fori_loop(0, n_chunks, chunk, acc0)
    y_ref[...] = acc.astype(y_ref.dtype)


def _vmem_limit_bytes(needed):
    try:
        cap = pltpu.get_tpu_info().vmem_capacity_bytes
    except Exception:
        cap = 64 << 20          # conservative fallback: v7x per-TC capacity
    limit = min(cap * 3 // 4, max(needed + (8 << 20), 32 << 20))
    return int(max(limit, needed + (4 << 20)))


def implicit_long_conv(x, k, block_t=None, block_h=None):
    """y[b,t,h] = x[b,t,h] + sum_{d<=t} k[d,h] * x[b,t-d,h].   x: (B,T,H), k: (T,H)."""
    B, T, H = x.shape
    assert k.shape == (T, H), (k.shape, (T, H))

    if block_t is None:
        block_t = 128 if T >= 128 else _round_up(T, _UNROLL)
    block_t = max(_UNROLL, _round_up(block_t, _UNROLL))
    T_pad = _round_up(T, block_t)

    if block_h is None:
        block_h = _LANE                       # lane-dense, low vreg pressure
    assert block_h % _LANE == 0
    H_pad = _round_up(H, block_h)

    k = k.astype(jnp.float32)
    if (T_pad, H_pad) != (T, H):
        # Zero padding is semantically inert: padded k rows / x rows & channels
        # contribute 0 to valid outputs; padded outputs are sliced off below.
        x = jnp.pad(x, ((0, 0), (0, T_pad - T), (0, H_pad - H)))
        k = jnp.pad(k, ((0, T_pad - T), (0, H_pad - H)))

    itemsize = jnp.dtype(x.dtype).itemsize
    needed = ((T_pad + block_t) * block_h * itemsize     # xpad scratch (x dtype)
              + T_pad * block_h * 4                      # kbuf scratch (f32)
              + 2 * block_t * block_h * itemsize)        # double-buffered out tile

    grid = (B, H_pad // block_h, T_pad // block_t)

    y = pl.pallas_call(
        conv_kernel,
        out_shape=jax.ShapeDtypeStruct((B, T_pad, H_pad), x.dtype),
        grid=grid,
        in_specs=[
            pl.BlockSpec(memory_space=pl.ANY),   # x stays in HBM; manual DMA
            pl.BlockSpec(memory_space=pl.ANY),   # k stays in HBM; manual DMA
        ],
        out_specs=pl.BlockSpec((None, block_t, block_h), lambda b, h, i: (b, i, h)),
        scratch_shapes=[
            pltpu.VMEM((block_t + T_pad, block_h), x.dtype),   # zero-padded x slab
            pltpu.VMEM((T_pad, block_h), jnp.float32),         # filter slab
            pltpu.SemaphoreType.DMA((2,)),
        ],
        compiler_params=pltpu.CompilerParams(
            dimension_semantics=("parallel", "parallel", "arbitrary"),
            vmem_limit_bytes=_vmem_limit_bytes(needed),
        ),
    )(x, k)

    if (T_pad, H_pad) != (T, H):
        y = y[:, :T, :H]
    return y


# ----------------------------------------------------------------------------
# Module glue: positional embedding + implicit filter MLP (plain XLA — tiny)
# ----------------------------------------------------------------------------
def positional_embedding(d_emb, max_len, seq_len):
    assert d_emb % 2 == 1 and d_emb >= 3, "d_emb must be odd and >= 3"
    L = max_len
    t = jnp.linspace(0.0, 1.0, L, dtype=jnp.float32)[:, None]                 # (L,1)
    t_rescaled = jnp.linspace(0.0, L - 1, L, dtype=jnp.float32)[:, None]      # (L,1)
    w = 2.0 * math.pi * t_rescaled / L
    bands = (d_emb - 1) // 2
    f = jnp.linspace(1e-4, bands - 1, bands, dtype=jnp.float32)[None, :]      # (1,bands)
    zc = jnp.exp(-1j * (f * w).astype(jnp.complex64))                         # (L,bands)
    z = jnp.concatenate([t, jnp.real(zc), jnp.imag(zc)], axis=-1)             # (L,d_emb)
    return z[:seq_len]


def compute_filter(z, w1, b1, w2, b2):
    # d_emb=3 / d_hidden=16 contractions are <3% MXU tiles — plain XLA.
    h = jnp.maximum(z @ w1 + b1, 0.0)
    return (h @ w2 + b2).astype(jnp.float32)                                  # (T, H)


def implicit_long_convolution_forward(x, params, d_emb, max_len,
                                      block_t=None, block_h=None):
    """x: [B, T, H] -> y: [B, T, H]"""
    T = x.shape[1]
    z = positional_embedding(d_emb, max_len, T)
    k = compute_filter(z, params["w1"], params["b1"], params["w2"], params["b2"])
    return implicit_long_conv(x, k, block_t=block_t, block_h=block_h)


# ----------------------------------------------------------------------------
# main
# ----------------------------------------------------------------------------
if __name__ == "__main__":
    def make_params(key, d_emb, d_hidden, H):
        k1, k2, k3, k4 = jax.random.split(key, 4)
        return {
            "w1": jax.random.normal(k1, (d_emb, d_hidden), jnp.float32) * 0.5,
            "b1": jax.random.normal(k2, (1, d_hidden), jnp.float32) * 0.1,
            "w2": jax.random.normal(k3, (d_hidden, H), jnp.float32) * 0.5,
            "b2": jax.random.normal(k4, (1, H), jnp.float32) * 0.1,
        }

    def reference(x, k):
        x64 = np.asarray(x, np.float64)
        k64 = np.asarray(k, np.float64)
        _, T, _ = x64.shape
        y = x64.copy()
        for t in range(T):
            y[:, t, :] += np.einsum("bsh,sh->bh", x64[:, : t + 1, :], k64[t::-1, :])
        return y

    d_emb, d_hidden = 3, 16
    key = jax.random.PRNGKey(0)
    kp1, kx1, kp2, kx2 = jax.random.split(key, 4)

    # Case 1: lane-aligned shapes, multiple T and H tiles (grid 2x2x2), defaults.
    B, T, H, max_len = 2, 256, 256, 256
    params = make_params(kp1, d_emb, d_hidden, H)
    x = jax.random.normal(kx1, (B, T, H), jnp.float32)
    y = jax.block_until_ready(
        implicit_long_convolution_forward(x, params, d_emb, max_len))
    z = positional_embedding(d_emb, max_len, T)
    k_f = compute_filter(z, params["w1"], params["b1"], params["w2"], params["b2"])
    np.testing.assert_allclose(np.asarray(y, np.float64), reference(x, k_f),
                               rtol=2e-3, atol=2e-3)

    # Case 2: ragged shapes exercising the T/H zero-padding path + small tiles.
    B2, T2, H2, max_len2 = 1, 20, 40, 64
    params2 = make_params(kp2, d_emb, d_hidden, H2)
    x2 = jax.random.normal(kx2, (B2, T2, H2), jnp.float32)
    y2 = jax.block_until_ready(
        implicit_long_convolution_forward(x2, params2, d_emb, max_len2))
    z2 = positional_embedding(d_emb, max_len2, T2)
    k2_f = compute_filter(z2, params2["w1"], params2["b1"], params2["w2"], params2["b2"])
    np.testing.assert_allclose(np.asarray(y2, np.float64), reference(x2, k2_f),
                               rtol=2e-3, atol=2e-3)

    print("KERNEL_OK")
</pallas_src>

<mosaic_0001>
module attributes {stable_mosaic.version = 11 : i64} {
  func.func @conv_kernel(%arg0: i32, %arg1: i32, %arg2: i32, %arg3: memref<2x256x256xf32, #tpu.memory_space<any>>, %arg4: memref<256x256xf32, #tpu.memory_space<any>>, %arg5: memref<1x128x128xf32, #tpu.memory_space<vmem>>, %arg6: memref<384x128xf32, #tpu.memory_space<vmem>>, %arg7: memref<256x128xf32, #tpu.memory_space<vmem>>, %arg8: memref<2x!tpu.dma_semaphore, #tpu.memory_space<semaphore_mem>>) attributes {dimension_semantics = [#tpu.dimension_semantics<parallel>, #tpu.dimension_semantics<parallel>, #tpu.dimension_semantics<arbitrary>], iteration_bounds = array<i64: 2, 2, 2>, scalar_prefetch = 0 : i64, scratch_operands = 3 : i64, tpu.core_type = #tpu.core_type<tc>, window_params = [{}, {}, {transform_indices = @transform_2, window_bounds = array<i64: 1, 128, 128>}]} {
    %c128_i32 = arith.constant 128 : i32
    %0 = arith.muli %arg1, %c128_i32 : i32
    %1 = tpu.assume_multiple %0, 128 : i32
    %c0_i32 = arith.constant 0 : i32
    %2 = arith.cmpi eq, %arg2, %c0_i32 : i32
    %3 = arith.extui %2 : i1 to i32
    %c0_i32_0 = arith.constant 0 : i32
    %4 = arith.cmpi ne, %3, %c0_i32_0 : i32
    scf.if %4 {
      %cst = arith.constant 0.000000e+00 : f32
      %18 = vector.broadcast %cst : f32 to vector<128x128xf32>
      %c0_8 = arith.constant 0 : index
      %c0_9 = arith.constant 0 : index
      %19 = vector.load %arg6[%c0_8, %c0_9] : memref<384x128xf32, #tpu.memory_space<vmem>>, vector<128x128xf32>
      tpu.vector_store %arg6[%c0_8, %c0_9], %18 {strides = array<i32>} : memref<384x128xf32, #tpu.memory_space<vmem>>, vector<128x128xf32>,
      %c0_i32_10 = arith.constant 0 : i32
      %c0_i32_11 = arith.constant 0 : i32
      %20 = tpu.memref_slice %arg3[%arg0, %c0_i32_11, %1] : memref<2x256x256xf32, #tpu.memory_space<any>> -> memref<1x256x128xf32, #tpu.memory_space<any>>
      %21 = tpu.memref_squeeze %20 : memref<1x256x128xf32, #tpu.memory_space<any>> -> memref<256x128xf32, #tpu.memory_space<any>>
      %c128_i32_12 = arith.constant 128 : i32
      %c0_i32_13 = arith.constant 0 : i32
      %22 = tpu.memref_slice %arg6[%c128_i32_12, %c0_i32_13] : memref<384x128xf32, #tpu.memory_space<vmem>> -> memref<256x128xf32, #tpu.memory_space<vmem>>
      %23 = tpu.memref_slice %arg8[%c0_i32_10] : memref<2x!tpu.dma_semaphore, #tpu.memory_space<semaphore_mem>> -> memref<1x!tpu.dma_semaphore, #tpu.memory_space<semaphore_mem>>
      %24 = tpu.memref_squeeze %23 : memref<1x!tpu.dma_semaphore, #tpu.memory_space<semaphore_mem>> -> memref<!tpu.dma_semaphore, #tpu.memory_space<semaphore_mem>>
      tpu.enqueue_dma source(%21 : memref<256x128xf32, #tpu.memory_space<any>>) target(%22 : memref<256x128xf32, #tpu.memory_space<vmem>>) target_semaphore(%24 : memref<!tpu.dma_semaphore, #tpu.memory_space<semaphore_mem>>)
      %c1_i32_14 = arith.constant 1 : i32
      %c0_i32_15 = arith.constant 0 : i32
      %25 = tpu.memref_slice %arg4[%c0_i32_15, %1] : memref<256x256xf32, #tpu.memory_space<any>> -> memref<256x128xf32, #tpu.memory_space<any>>
      %26 = tpu.memref_slice %arg8[%c1_i32_14] : memref<2x!tpu.dma_semaphore, #tpu.memory_space<semaphore_mem>> -> memref<1x!tpu.dma_semaphore, #tpu.memory_space<semaphore_mem>>
      %27 = tpu.memref_squeeze %26 : memref<1x!tpu.dma_semaphore, #tpu.memory_space<semaphore_mem>> -> memref<!tpu.dma_semaphore, #tpu.memory_space<semaphore_mem>>
      tpu.enqueue_dma source(%25 : memref<256x128xf32, #tpu.memory_space<any>>) target(%arg7 : memref<256x128xf32, #tpu.memory_space<vmem>>) target_semaphore(%27 : memref<!tpu.dma_semaphore, #tpu.memory_space<semaphore_mem>>)
      %c0_i32_16 = arith.constant 0 : i32
      %c0_i32_17 = arith.constant 0 : i32
      %28 = tpu.memref_slice %arg3[%arg0, %c0_i32_17, %1] : memref<2x256x256xf32, #tpu.memory_space<any>> -> memref<1x256x128xf32, #tpu.memory_space<any>>
      %29 = tpu.memref_squeeze %28 : memref<1x256x128xf32, #tpu.memory_space<any>> -> memref<256x128xf32, #tpu.memory_space<any>>
      %c128_i32_18 = arith.constant 128 : i32
      %c0_i32_19 = arith.constant 0 : i32
      %30 = tpu.memref_slice %arg6[%c128_i32_18, %c0_i32_19] : memref<384x128xf32, #tpu.memory_space<vmem>> -> memref<256x128xf32, #tpu.memory_space<vmem>>
      %31 = tpu.memref_slice %arg8[%c0_i32_16] : memref<2x!tpu.dma_semaphore, #tpu.memory_space<semaphore_mem>> -> memref<1x!tpu.dma_semaphore, #tpu.memory_space<semaphore_mem>>
      %32 = tpu.memref_squeeze %31 : memref<1x!tpu.dma_semaphore, #tpu.memory_space<semaphore_mem>> -> memref<!tpu.dma_semaphore, #tpu.memory_space<semaphore_mem>>
      tpu.wait_dma2 semaphore(%32 : memref<!tpu.dma_semaphore, #tpu.memory_space<semaphore_mem>>) src(%29 : memref<256x128xf32, #tpu.memory_space<any>>) dst(%30 : memref<256x128xf32, #tpu.memory_space<vmem>>)
      %c1_i32_20 = arith.constant 1 : i32
      %c0_i32_21 = arith.constant 0 : i32
      %33 = tpu.memref_slice %arg4[%c0_i32_21, %1] : memref<256x256xf32, #tpu.memory_space<any>> -> memref<256x128xf32, #tpu.memory_space<any>>
      %34 = tpu.memref_slice %arg8[%c1_i32_20] : memref<2x!tpu.dma_semaphore, #tpu.memory_space<semaphore_mem>> -> memref<1x!tpu.dma_semaphore, #tpu.memory_space<semaphore_mem>>
      %35 = tpu.memref_squeeze %34 : memref<1x!tpu.dma_semaphore, #tpu.memory_space<semaphore_mem>> -> memref<!tpu.dma_semaphore, #tpu.memory_space<semaphore_mem>>
      tpu.wait_dma2 semaphore(%35 : memref<!tpu.dma_semaphore, #tpu.memory_space<semaphore_mem>>) src(%33 : memref<256x128xf32, #tpu.memory_space<any>>) dst(%arg7 : memref<256x128xf32, #tpu.memory_space<vmem>>)
    } else {
    }
    %c1_i32 = arith.constant 1 : i32
    %5 = arith.addi %arg2, %c1_i32 : i32
    %c128_i32_1 = arith.constant 128 : i32
    %6 = arith.muli %5, %c128_i32_1 : i32
    %7 = tpu.assume_multiple %6, 8 : i32
    %8 = arith.index_cast %7 : i32 to index
    %c0 = arith.constant 0 : index
    %9 = vector.load %arg6[%8, %c0] : memref<384x128xf32, #tpu.memory_space<vmem>>, vector<128x128xf32>
    %c1_i32_2 = arith.constant 1 : i32
    %10 = arith.addi %arg2, %c1_i32_2 : i32
    %c16_i32 = arith.constant 16 : i32
    %11 = arith.muli %10, %c16_i32 : i32
    %c0_i32_3 = arith.constant 0 : i32
    %12 = arith.subi %11, %c0_i32_3 : i32
    %13 = arith.addi %c0_i32_3, %12 : i32
    %c1_i32_4 = arith.constant 1 : i32
    %14 = scf.for %arg9 = %c0_i32_3 to %13 step %c1_i32_4 iter_args(%arg10 = %9) -> (vector<128x128xf32>)  : i32 {
      %c8_i32 = arith.constant 8 : i32
      %18 = arith.muli %arg9, %c8_i32 : i32
      %19 = tpu.assume_multiple %18, 8 : i32
      %20 = arith.index_cast %19 : i32 to index
      %c0_8 = arith.constant 0 : index
      %21 = vector.load %arg7[%20, %c0_8] : memref<256x128xf32, #tpu.memory_space<vmem>>, vector<8x128xf32>
      %c0_i32_9 = arith.constant 0 : i32
      %22 = arith.addi %19, %c0_i32_9 : i32
      %23 = arith.subi %7, %22 : i32
      %24 = arith.index_cast %23 : i32 to index
      %c0_10 = arith.constant 0 : index
      %25 = vector.load %arg6[%24, %c0_10] : memref<384x128xf32, #tpu.memory_space<vmem>>, vector<128x128xf32>
      %26 = vector.extract_strided_slice %21 {offsets = [0, 0], sizes = [1, 128], strides = [1, 1]} : vector<8x128xf32> to vector<1x128xf32>
      %27 = vector.broadcast %26 : vector<1x128xf32> to vector<128x128xf32>
      %28 = arith.mulf %25, %27 : vector<128x128xf32>
      %29 = arith.addf %arg10, %28 : vector<128x128xf32>
      %c1_i32_11 = arith.constant 1 : i32
      %30 = arith.addi %19, %c1_i32_11 : i32
      %31 = arith.subi %7, %30 : i32
      %32 = arith.index_cast %31 : i32 to index
      %c0_12 = arith.constant 0 : index
      %33 = vector.load %arg6[%32, %c0_12] : memref<384x128xf32, #tpu.memory_space<vmem>>, vector<128x128xf32>
      %34 = vector.extract_strided_slice %21 {offsets = [1, 0], sizes = [1, 128], strides = [1, 1]} : vector<8x128xf32> to vector<1x128xf32>
      %35 = vector.broadcast %34 : vector<1x128xf32> to vector<128x128xf32>
      %36 = arith.mulf %33, %35 : vector<128x128xf32>
      %37 = arith.addf %29, %36 : vector<128x128xf32>
      %c2_i32 = arith.constant 2 : i32
      %38 = arith.addi %19, %c2_i32 : i32
      %39 = arith.subi %7, %38 : i32
      %40 = arith.index_cast %39 : i32 to index
      %c0_13 = arith.constant 0 : index
      %41 = vector.load %arg6[%40, %c0_13] : memref<384x128xf32, #tpu.memory_space<vmem>>, vector<128x128xf32>
      %42 = vector.extract_strided_slice %21 {offsets = [2, 0], sizes = [1, 128], strides = [1, 1]} : vector<8x128xf32> to vector<1x128xf32>
      %43 = vector.broadcast %42 : vector<1x128xf32> to vector<128x128xf32>
      %44 = arith.mulf %41, %43 : vector<128x128xf32>
      %45 = arith.addf %37, %44 : vector<128x128xf32>
      %c3_i32 = arith.constant 3 : i32
      %46 = arith.addi %19, %c3_i32 : i32
      %47 = arith.subi %7, %46 : i32
      %48 = arith.index_cast %47 : i32 to index
      %c0_14 = arith.constant 0 : index
      %49 = vector.load %arg6[%48, %c0_14] : memref<384x128xf32, #tpu.memory_space<vmem>>, vector<128x128xf32>
      %50 = vector.extract_strided_slice %21 {offsets = [3, 0], sizes = [1, 128], strides = [1, 1]} : vector<8x128xf32> to vector<1x128xf32>
      %51 = vector.broadcast %50 : vector<1x128xf32> to vector<128x128xf32>
      %52 = arith.mulf %49, %51 : vector<128x128xf32>
      %53 = arith.addf %45, %52 : vector<128x128xf32>
      %c4_i32 = arith.constant 4 : i32
      %54 = arith.addi %19, %c4_i32 : i32
      %55 = arith.subi %7, %54 : i32
      %56 = arith.index_cast %55 : i32 to index
      %c0_15 = arith.constant 0 : index
      %57 = vector.load %arg6[%56, %c0_15] : memref<384x128xf32, #tpu.memory_space<vmem>>, vector<128x128xf32>
      %58 = vector.extract_strided_slice %21 {offsets = [4, 0], sizes = [1, 128], strides = [1, 1]} : vector<8x128xf32> to vector<1x128xf32>
      %59 = vector.broadcast %58 : vector<1x128xf32> to vector<128x128xf32>
      %60 = arith.mulf %57, %59 : vector<128x128xf32>
      %61 = arith.addf %53, %60 : vector<128x128xf32>
      %c5_i32 = arith.constant 5 : i32
      %62 = arith.addi %19, %c5_i32 : i32
      %63 = arith.subi %7, %62 : i32
      %64 = arith.index_cast %63 : i32 to index
      %c0_16 = arith.constant 0 : index
      %65 = vector.load %arg6[%64, %c0_16] : memref<384x128xf32, #tpu.memory_space<vmem>>, vector<128x128xf32>
      %66 = vector.extract_strided_slice %21 {offsets = [5, 0], sizes = [1, 128], strides = [1, 1]} : vector<8x128xf32> to vector<1x128xf32>
      %67 = vector.broadcast %66 : vector<1x128xf32> to vector<128x128xf32>
      %68 = arith.mulf %65, %67 : vector<128x128xf32>
      %69 = arith.addf %61, %68 : vector<128x128xf32>
      %c6_i32 = arith.constant 6 : i32
      %70 = arith.addi %19, %c6_i32 : i32
      %71 = arith.subi %7, %70 : i32
      %72 = arith.index_cast %71 : i32 to index
      %c0_17 = arith.constant 0 : index
      %73 = vector.load %arg6[%72, %c0_17] : memref<384x128xf32, #tpu.memory_space<vmem>>, vector<128x128xf32>
      %74 = vector.extract_strided_slice %21 {offsets = [6, 0], sizes = [1, 128], strides = [1, 1]} : vector<8x128xf32> to vector<1x128xf32>
      %75 = vector.broadcast %74 : vector<1x128xf32> to vector<128x128xf32>
      %76 = arith.mulf %73, %75 : vector<128x128xf32>
      %77 = arith.addf %69, %76 : vector<128x128xf32>
      %c7_i32 = arith.constant 7 : i32
      %78 = arith.addi %19, %c7_i32 : i32
      %79 = arith.subi %7, %78 : i32
      %80 = arith.index_cast %79 : i32 to index
      %c0_18 = arith.constant 0 : index
      %81 = vector.load %arg6[%80, %c0_18] : memref<384x128xf32, #tpu.memory_space<vmem>>, vector<128x128xf32>
      %82 = vector.extract_strided_slice %21 {offsets = [7, 0], sizes = [1, 128], strides = [1, 1]} : vector<8x128xf32> to vector<1x128xf32>
      %83 = vector.broadcast %82 : vector<1x128xf32> to vector<128x128xf32>
      %84 = arith.mulf %81, %83 : vector<128x128xf32>
      %85 = arith.addf %77, %84 : vector<128x128xf32>
      scf.yield %85 : vector<128x128xf32>
    }
    %c0_5 = arith.constant 0 : index
    %c0_6 = arith.constant 0 : index
    %c0_7 = arith.constant 0 : index
    %15 = vector.load %arg5[%c0_5, %c0_6, %c0_7] : memref<1x128x128xf32, #tpu.memory_space<vmem>>, vector<1x128x128xf32>
    %16 = vector.shape_cast %15 : vector<1x128x128xf32> to vector<128x128xf32>
    %17 = vector.shape_cast %14 : vector<128x128xf32> to vector<1x128x128xf32>
    tpu.vector_store %arg5[%c0_5, %c0_6, %c0_7], %17 {strides = array<i32>} : memref<1x128x128xf32, #tpu.memory_space<vmem>>, vector<1x128x128xf32>,
    return
  }
  func.func @transform_2(%arg0: i32, %arg1: i32, %arg2: i32) -> (i32, i32, i32) {
    %c0_i32 = arith.constant 0 : i32
    return %arg0, %arg2, %arg1 : i32, i32, i32
  }
}

</mosaic_0001>

<llo_original>
// kernel: tpu_custom_call.1
$region0: #{tpu_custom_call.1}
  #allocation0 [shape = 'u32[]', space=smem, size = 0x4, offset = 0x4, fixed_abs, tag = 'smem constant byte address 0x4 - core index']
  #allocation1 [shape = 'u32[144,128]{1,0:T(1,128)}', space=vmem, size = 0x12000, scoped, tag = 'internal scratch']
  #allocation2 [shape = 'f32[384,128]{1,0:T(8,128)}', space=vmem, size = 0x30000, scoped, tag = 'scratch operand']
  #allocation3 [shape = 'f32[256,128]{1,0:T(8,128)}', space=vmem, size = 0x20000, scoped, tag = 'scratch operand']
  #allocation4 [shape = 's32[2]{0}', space=sflag, size = 0x8, scoped, tag = 'scratch operand']
  #allocation7 [shape = 's32[]', space=sflag, size = 0x4, offset = 0, fixed_abs, tag = 'sflag constant byte address 0x0 - dummy sync flag']
  #allocation8 [shape = 's32[]', space=sflag, size = 0x4, offset = 0, fixed_abs, tag = 'sflag constant byte address 0x0 - dummy sync flag']
  %s0 = inlined_call_operand.hbm [shape: f32[2,256,256], index: 0, kind: input, shape index: {}]
  %s1 = inlined_call_operand.hbm [shape: f32[256,256], index: 1, kind: input, shape index: {}]
  %s2 = inlined_call_operand.hbm [shape: f32[2,256,256], index: 2, kind: output, shape index: {}]
  %s3 = sld [smem:[#allocation0]]
  $region36: #{tpu_custom_call.1} parent=0
    _
  %s5 = ssub.s32 1, %s3
  %s6 = scalar_select 0, %s5, %s3
  $region1: #{tpu_custom_call.1} parent=0
    #allocation5 [shape = 'u8[131072]{0}', space=vmem, size = 0x20000, scoped, tag = 'output window, operand 0']
    #allocation6 [shape = 's32[2]{0}', space=sflag, size = 0x8, scoped, tag = 'scoped memory for tpu_custom_call.1']
    %7 = vsyncpa [#allocation6], 0
    %s8 = scalar_lea.sflag [#allocation6], 1
    %9 = vsyncpa %s8, 0
    loop: start=0, step=1, limit=9
    $region2: #{tpu_custom_call.1} parent=1 // loop_pre_header
      _
    $region3: #{tpu_custom_call.1} parent=1 // loop_header
      %s11 = sphi 0, %s15
      %p12 = scmp.ge.s32.totalorder %s11, 9
      %s17 = sphi 0, %s33
      %s18 = sphi 0, %s29
      %s19 = sphi 0, %s25
      %s20 = sphi 0, %s17
      %s21 = sphi 0, %s18
      %s22 = sphi 0, %s19
      %s40 = sphi 0, %s42
      %s43 = sphi 0, %s40
      %s53 = sphi 0, %s43
    $region4: #{tpu_custom_call.1} parent=1 // loop_header_branch
      %14 = sbr.rel (%p12) target = $region8
    $region5: #{tpu_custom_call.1} parent=1 // loop_body
      %s16 = ssub.s32 %s11, 1
      %s23 = sadd.s32 1, %s19
      %p24 = scmp.ge.s32.totalorder %s23, 2
      %s25 = scalar_select %p24, 0, %s23
      %s26 = sadd.s32 1, %s18
      %s27 = scalar_select %p24, %s26, %s18
      %p28 = scmp.ge.s32.totalorder %s27, 2
      %s29 = scalar_select %p28, 0, %s27
      %s30 = sadd.s32 1, %s17
      %s31 = scalar_select %p28, %s30, %s17
      %p32 = scmp.ge.s32.totalorder %s31, 2
      %s33 = scalar_select %p32, 0, %s31
      %s34 = ssub.s32 %s17, %s33
      %s35 = ssub.s32 %s19, %s25
      %s36 = sor.u32 %s34, %s35
      %s37 = ssub.s32 %s18, %s29
      %s38 = sor.u32 %s36, %s37
      %p39 = scmp.eq.s32.totalorder %s38, 0
      %s41 = sadd.s32 %s40, 1
      %s42 = scalar_select %p39, %s40, %s41
      %p44 = pneg %p39
      %p45 = scmp.eq.s32.totalorder %s11, 7
      %p46 = por %p44, %p45
      %p47 = scmp.ne.s32.totalorder %s40, %s43
      %p48 = scmp.eq.s32.totalorder %s11, 0
      %p49 = por %p47, %p48
      %p50 = scmp.ne.s32.totalorder %s40, %s43
      %p51 = scmp.eq.s32.totalorder %s16, 7
      %p52 = por %p50, %p51
      %p54 = scmp.ne.s32.totalorder %s43, %s53
      %p55 = scmp.eq.s32.totalorder %s16, 0
      %p56 = por %p54, %p55
      %p57 = scmp.lt.s32.totalorder %s11, 8
      // Predicated region
      $region9: #{tpu_custom_call.1} parent=5 // pred_check
        %p58 = pneg %p57
      $region10: #{tpu_custom_call.1} parent=5 // pred_check_branch
        %60 = sbr.rel (%p58) target = $region12
      $region11: #{tpu_custom_call.1} parent=5 // pred_region
        %p61 = pneg %p49
        %p62 = pneg %p46
        %s63 = sand.u32 %s40, 1
        %s64 = scalar_lea.sflag [#allocation6], %s63
        %s65 = sand.u32 %s40, 1
        %s66 = smul.addr %s65, 128
        %s67 = scalar_lea.vmem [#allocation5], %s66
        %s68 = smul.u32 16, %s19
        %s69 = smul.u32 %s18, 128
        %p70 = scmp.eq.s32.totalorder %s19, 0
        // Predicated region
        $region13: #{tpu_custom_call.1} parent=11 // pred_check
          %p71 = pneg %p70
        $region14: #{tpu_custom_call.1} parent=11 // pred_check_branch
          %73 = sbr.rel (%p71) target = $region16
        $region15: #{tpu_custom_call.1} parent=11 // pred_region
          %74 = vst [vmem:[#allocation2] sm:$0xff] 0.0
          %75 = vst [vmem:[#allocation2 + $0x8] sm:$0xff] 0.0
          %76 = vst [vmem:[#allocation2 + $0x10] sm:$0xff] 0.0
          %77 = vst [vmem:[#allocation2 + $0x18] sm:$0xff] 0.0
          %78 = vst [vmem:[#allocation2 + $0x20] sm:$0xff] 0.0
          %79 = vst [vmem:[#allocation2 + $0x28] sm:$0xff] 0.0
          %80 = vst [vmem:[#allocation2 + $0x30] sm:$0xff] 0.0
          %81 = vst [vmem:[#allocation2 + $0x38] sm:$0xff] 0.0
          %82 = vst [vmem:[#allocation2 + $0x40] sm:$0xff] 0.0
          %83 = vst [vmem:[#allocation2 + $0x48] sm:$0xff] 0.0
          %84 = vst [vmem:[#allocation2 + $0x50] sm:$0xff] 0.0
          %85 = vst [vmem:[#allocation2 + $0x58] sm:$0xff] 0.0
          %86 = vst [vmem:[#allocation2 + $0x60] sm:$0xff] 0.0
          %87 = vst [vmem:[#allocation2 + $0x68] sm:$0xff] 0.0
          %88 = vst [vmem:[#allocation2 + $0x70] sm:$0xff] 0.0
          %89 = vst [vmem:[#allocation2 + $0x78] sm:$0xff] 0.0
          %s90 = sshra.s32 %s69, 7
          %s91 = sand.u32 %s69, 127
          %s92 = smul.u32 %s17, 64
          %s93 = sadd.s32 %s90, %s92
          %s94 = smul.addr %s93, 128
          %s95 = scalar_lea.hbm %s0, %s94
          %s96 = scalar_lea.vmem [#allocation2], 128
          %s98 = sshll.u32 %s96, 4
          %s99 = int_to_ptr.vmem [resolvable:$true] %s98
          %101 = dma.hbm_to_vmem [thread:$0]  %s95, 4096, %s99, [#allocation4], 256, 128, 8
          %s102 = smul.addr %s90, 128
          %s103 = scalar_lea.hbm %s1, %s102
          %s104 = scalar_lea.sflag [#allocation4], 1
          %s106 = sshll.u32 [#allocation3], 4
          %s107 = int_to_ptr.vmem [resolvable:$true] %s106
          %109 = dma.hbm_to_vmem [thread:$0]  %s103, 4096, %s107, %s104, 256, 128, 8
          %s110 = smul.u32 8, 32
          %s111 = smul.u32 %s110, 1
          %s112 = sshll.u32 %s111, 4
          %113 = dma.done [#allocation4], %s112
          %s114 = sshll.u32 %s111, 4
          %115 = dma.done %s104, %s114
        $region16: #{tpu_custom_call.1} parent=11 // pred_fallthru
          _
        %s116 = sadd.s32 %s19, 1
        %s117 = smul.u32 %s116, 128
        %s118 = scalar_lea.vmem [#allocation2], %s117
        %v119 = vld [vmem:[%s118] sm:$0xff]
        %v120 = vld [vmem:[%s118 + $0x8] sm:$0xff]
        %v121 = vld [vmem:[%s118 + $0x10] sm:$0xff]
        %v122 = vld [vmem:[%s118 + $0x18] sm:$0xff]
        %v123 = vld [vmem:[%s118 + $0x20] sm:$0xff]
        %v124 = vld [vmem:[%s118 + $0x28] sm:$0xff]
        %v125 = vld [vmem:[%s118 + $0x30] sm:$0xff]
        %v126 = vld [vmem:[%s118 + $0x38] sm:$0xff]
        %v127 = vld [vmem:[%s118 + $0x40] sm:$0xff]
        %v128 = vld [vmem:[%s118 + $0x48] sm:$0xff]
        %v129 = vld [vmem:[%s118 + $0x50] sm:$0xff]
        %v130 = vld [vmem:[%s118 + $0x58] sm:$0xff]
        %v131 = vld [vmem:[%s118 + $0x60] sm:$0xff]
        %v132 = vld [vmem:[%s118 + $0x68] sm:$0xff]
        %v133 = vld [vmem:[%s118 + $0x70] sm:$0xff]
        %v134 = vld [vmem:[%s118 + $0x78] sm:$0xff]
        %s135 = smul.u32 %s116, 16
        // While loop
        $region17: #{tpu_custom_call.1} parent=11 // loop_pre_header
          _
        $region18: #{tpu_custom_call.1} parent=11 // loop_header
          %s137 = sphi 0, %s139
          %p138 = scmp.ge.s32.totalorder %s137, %s135
          %v142 = vphi %v119, %v584
          %v143 = vphi %v120, %v585
          %v144 = vphi %v121, %v586
          %v145 = vphi %v122, %v587
          %v146 = vphi %v123, %v588
          %v147 = vphi %v124, %v589
          %v148 = vphi %v125, %v590
          %v149 = vphi %v126, %v591
          %v150 = vphi %v127, %v592
          %v151 = vphi %v128, %v593
          %v152 = vphi %v129, %v594
          %v153 = vphi %v130, %v595
          %v154 = vphi %v131, %v596
          %v155 = vphi %v132, %v597
          %v156 = vphi %v133, %v598
          %v157 = vphi %v134, %v599
        $region19: #{tpu_custom_call.1} parent=11 // loop_header_branch
          %141 = sbr.rel (%p138) target = $region23
        $region20: #{tpu_custom_call.1} parent=11 // loop_body
          %s158 = smul.u32 %s137, 8
          %s159 = scalar_lea.vmem [#allocation3], %s158
          %v160 = vld [vmem:[%s159] sm:$0xff]
          %s161 = ssub.s32 %s117, %s158
          %s162 = scalar_lea.vmem [#allocation2], %s161
          %v163 = vld [vmem:[%s162] sm:$0xff]
          %v164 = vld [vmem:[%s162 + $0x8] sm:$0xff]
          %v165 = vld [vmem:[%s162 + $0x10] sm:$0xff]
          %v166 = vld [vmem:[%s162 + $0x18] sm:$0xff]
          %v167 = vld [vmem:[%s162 + $0x20] sm:$0xff]
          %v168 = vld [vmem:[%s162 + $0x28] sm:$0xff]
          %v169 = vld [vmem:[%s162 + $0x30] sm:$0xff]
          %v170 = vld [vmem:[%s162 + $0x38] sm:$0xff]
          %v171 = vld [vmem:[%s162 + $0x40] sm:$0xff]
          %v172 = vld [vmem:[%s162 + $0x48] sm:$0xff]
          %v173 = vld [vmem:[%s162 + $0x50] sm:$0xff]
          %v174 = vld [vmem:[%s162 + $0x58] sm:$0xff]
          %v175 = vld [vmem:[%s162 + $0x60] sm:$0xff]
          %v176 = vld [vmem:[%s162 + $0x68] sm:$0xff]
          %v177 = vld [vmem:[%s162 + $0x70] sm:$0xff]
          %v178 = vld [vmem:[%s162 + $0x78] sm:$0xff]
          %v179 = vlaneseq
          %v180 = vshrl.u32 %v179, 7
          %v181 = vsub.s32 0, %v180
          %v182 = vrot.slane %v160, %v181
          %v183 = vmul.f32 %v163, %v182
          %v184 = vmul.f32 %v164, %v182
          %v185 = vmul.f32 %v165, %v182
          %v186 = vmul.f32 %v166, %v182
          %v187 = vmul.f32 %v167, %v182
          %v188 = vmul.f32 %v168, %v182
          %v189 = vmul.f32 %v169, %v182
          %v190 = vmul.f32 %v170, %v182
          %v191 = vmul.f32 %v171, %v182
          %v192 = vmul.f32 %v172, %v182
          %v193 = vmul.f32 %v173, %v182
          %v194 = vmul.f32 %v174, %v182
          %v195 = vmul.f32 %v175, %v182
          %v196 = vmul.f32 %v176, %v182
          %v197 = vmul.f32 %v177, %v182
          %v198 = vmul.f32 %v178, %v182
          %v199 = vadd.f32 %v142, %v183
          %v200 = vadd.f32 %v143, %v184
          %v201 = vadd.f32 %v144, %v185
          %v202 = vadd.f32 %v145, %v186
          %v203 = vadd.f32 %v146, %v187
          %v204 = vadd.f32 %v147, %v188
          %v205 = vadd.f32 %v148, %v189
          %v206 = vadd.f32 %v149, %v190
          %v207 = vadd.f32 %v150, %v191
          %v208 = vadd.f32 %v151, %v192
          %v209 = vadd.f32 %v152, %v193
          %v210 = vadd.f32 %v153, %v194
          %v211 = vadd.f32 %v154, %v195
          %v212 = vadd.f32 %v155, %v196
          %v213 = vadd.f32 %v156, %v197
          %v214 = vadd.f32 %v157, %v198
          %s215 = sadd.s32 %s158, 1
          %s216 = ssub.s32 %s117, %s215
          %s217 = scalar_lea.vmem [#allocation2], %s216
          %v218 = vld [vmem:[%s217] sm:$0xff]
          %v219 = vld [vmem:[%s217 + $0x8] sm:$0xff]
          %v220 = vld [vmem:[%s217 + $0x10] sm:$0xff]
          %v221 = vld [vmem:[%s217 + $0x18] sm:$0xff]
          %v222 = vld [vmem:[%s217 + $0x20] sm:$0xff]
          %v223 = vld [vmem:[%s217 + $0x28] sm:$0xff]
          %v224 = vld [vmem:[%s217 + $0x30] sm:$0xff]
          %v225 = vld [vmem:[%s217 + $0x38] sm:$0xff]
          %v226 = vld [vmem:[%s217 + $0x40] sm:$0xff]
          %v227 = vld [vmem:[%s217 + $0x48] sm:$0xff]
          %v228 = vld [vmem:[%s217 + $0x50] sm:$0xff]
          %v229 = vld [vmem:[%s217 + $0x58] sm:$0xff]
          %v230 = vld [vmem:[%s217 + $0x60] sm:$0xff]
          %v231 = vld [vmem:[%s217 + $0x68] sm:$0xff]
          %v232 = vld [vmem:[%s217 + $0x70] sm:$0xff]
          %v233 = vld [vmem:[%s217 + $0x78] sm:$0xff]
          %v234 = vlaneseq
          %v235 = vshrl.u32 %v234, 7
          %v236 = vsub.s32 1, %v235
          %v237 = vrot.slane %v160, %v236
          %v238 = vmul.f32 %v218, %v237
          %v239 = vmul.f32 %v219, %v237
          %v240 = vmul.f32 %v220, %v237
          %v241 = vmul.f32 %v221, %v237
          %v242 = vmul.f32 %v222, %v237
          %v243 = vmul.f32 %v223, %v237
          %v244 = vmul.f32 %v224, %v237
          %v245 = vmul.f32 %v225, %v237
          %v246 = vmul.f32 %v226, %v237
          %v247 = vmul.f32 %v227, %v237
          %v248 = vmul.f32 %v228, %v237
          %v249 = vmul.f32 %v229, %v237
          %v250 = vmul.f32 %v230, %v237
          %v251 = vmul.f32 %v231, %v237
          %v252 = vmul.f32 %v232, %v237
          %v253 = vmul.f32 %v233, %v237
          %v254 = vadd.f32 %v199, %v238
          %v255 = vadd.f32 %v200, %v239
          %v256 = vadd.f32 %v201, %v240
          %v257 = vadd.f32 %v202, %v241
          %v258 = vadd.f32 %v203, %v242
          %v259 = vadd.f32 %v204, %v243
          %v260 = vadd.f32 %v205, %v244
          %v261 = vadd.f32 %v206, %v245
          %v262 = vadd.f32 %v207, %v246
          %v263 = vadd.f32 %v208, %v247
          %v264 = vadd.f32 %v209, %v248
          %v265 = vadd.f32 %v210, %v249
          %v266 = vadd.f32 %v211, %v250
          %v267 = vadd.f32 %v212, %v251
          %v268 = vadd.f32 %v213, %v252
          %v269 = vadd.f32 %v214, %v253
          %s270 = sadd.s32 %s158, 2
          %s271 = ssub.s32 %s117, %s270
          %s272 = scalar_lea.vmem [#allocation2], %s271
          %v273 = vld [vmem:[%s272] sm:$0xff]
          %v274 = vld [vmem:[%s272 + $0x8] sm:$0xff]
          %v275 = vld [vmem:[%s272 + $0x10] sm:$0xff]
          %v276 = vld [vmem:[%s272 + $0x18] sm:$0xff]
          %v277 = vld [vmem:[%s272 + $0x20] sm:$0xff]
          %v278 = vld [vmem:[%s272 + $0x28] sm:$0xff]
          %v279 = vld [vmem:[%s272 + $0x30] sm:$0xff]
          %v280 = vld [vmem:[%s272 + $0x38] sm:$0xff]
          %v281 = vld [vmem:[%s272 + $0x40] sm:$0xff]
          %v282 = vld [vmem:[%s272 + $0x48] sm:$0xff]
          %v283 = vld [vmem:[%s272 + $0x50] sm:$0xff]
          %v284 = vld [vmem:[%s272 + $0x58] sm:$0xff]
          %v285 = vld [vmem:[%s272 + $0x60] sm:$0xff]
          %v286 = vld [vmem:[%s272 + $0x68] sm:$0xff]
          %v287 = vld [vmem:[%s272 + $0x70] sm:$0xff]
          %v288 = vld [vmem:[%s272 + $0x78] sm:$0xff]
          %v289 = vlaneseq
          %v290 = vshrl.u32 %v289, 7
          %v291 = vsub.s32 2, %v290
          %v292 = vrot.slane %v160, %v291
          %v293 = vmul.f32 %v273, %v292
          %v294 = vmul.f32 %v274, %v292
          %v295 = vmul.f32 %v275, %v292
          %v296 = vmul.f32 %v276, %v292
          %v297 = vmul.f32 %v277, %v292
          %v298 = vmul.f32 %v278, %v292
          %v299 = vmul.f32 %v279, %v292
          %v300 = vmul.f32 %v280, %v292
          %v301 = vmul.f32 %v281, %v292
          %v302 = vmul.f32 %v282, %v292
          %v303 = vmul.f32 %v283, %v292
          %v304 = vmul.f32 %v284, %v292
          %v305 = vmul.f32 %v285, %v292
          %v306 = vmul.f32 %v286, %v292
          %v307 = vmul.f32 %v287, %v292
          %v308 = vmul.f32 %v288, %v292
          %v309 = vadd.f32 %v254, %v293
          %v310 = vadd.f32 %v255, %v294
          %v311 = vadd.f32 %v256, %v295
          %v312 = vadd.f32 %v257, %v296
          %v313 = vadd.f32 %v258, %v297
          %v314 = vadd.f32 %v259, %v298
          %v315 = vadd.f32 %v260, %v299
          %v316 = vadd.f32 %v261, %v300
          %v317 = vadd.f32 %v262, %v301
          %v318 = vadd.f32 %v263, %v302
          %v319 = vadd.f32 %v264, %v303
          %v320 = vadd.f32 %v265, %v304
          %v321 = vadd.f32 %v266, %v305
          %v322 = vadd.f32 %v267, %v306
          %v323 = vadd.f32 %v268, %v307
          %v324 = vadd.f32 %v269, %v308
          %s325 = sadd.s32 %s158, 3
          %s326 = ssub.s32 %s117, %s325
          %s327 = scalar_lea.vmem [#allocation2], %s326
          %v328 = vld [vmem:[%s327] sm:$0xff]
          %v329 = vld [vmem:[%s327 + $0x8] sm:$0xff]
          %v330 = vld [vmem:[%s327 + $0x10] sm:$0xff]
          %v331 = vld [vmem:[%s327 + $0x18] sm:$0xff]
          %v332 = vld [vmem:[%s327 + $0x20] sm:$0xff]
          %v333 = vld [vmem:[%s327 + $0x28] sm:$0xff]
          %v334 = vld [vmem:[%s327 + $0x30] sm:$0xff]
          %v335 = vld [vmem:[%s327 + $0x38] sm:$0xff]
          %v336 = vld [vmem:[%s327 + $0x40] sm:$0xff]
          %v337 = vld [vmem:[%s327 + $0x48] sm:$0xff]
          %v338 = vld [vmem:[%s327 + $0x50] sm:$0xff]
          %v339 = vld [vmem:[%s327 + $0x58] sm:$0xff]
          %v340 = vld [vmem:[%s327 + $0x60] sm:$0xff]
          %v341 = vld [vmem:[%s327 + $0x68] sm:$0xff]
          %v342 = vld [vmem:[%s327 + $0x70] sm:$0xff]
          %v343 = vld [vmem:[%s327 + $0x78] sm:$0xff]
          %v344 = vlaneseq
          %v345 = vshrl.u32 %v344, 7
          %v346 = vsub.s32 3, %v345
          %v347 = vrot.slane %v160, %v346
          %v348 = vmul.f32 %v328, %v347
          %v349 = vmul.f32 %v329, %v347
          %v350 = vmul.f32 %v330, %v347
          %v351 = vmul.f32 %v331, %v347
          %v352 = vmul.f32 %v332, %v347
          %v353 = vmul.f32 %v333, %v347
          %v354 = vmul.f32 %v334, %v347
          %v355 = vmul.f32 %v335, %v347
          %v356 = vmul.f32 %v336, %v347
          %v357 = vmul.f32 %v337, %v347
          %v358 = vmul.f32 %v338, %v347
          %v359 = vmul.f32 %v339, %v347
          %v360 = vmul.f32 %v340, %v347
          %v361 = vmul.f32 %v341, %v347
          %v362 = vmul.f32 %v342, %v347
          %v363 = vmul.f32 %v343, %v347
          %v364 = vadd.f32 %v309, %v348
          %v365 = vadd.f32 %v310, %v349
          %v366 = vadd.f32 %v311, %v350
          %v367 = vadd.f32 %v312, %v351
          %v368 = vadd.f32 %v313, %v352
          %v369 = vadd.f32 %v314, %v353
          %v370 = vadd.f32 %v315, %v354
          %v371 = vadd.f32 %v316, %v355
          %v372 = vadd.f32 %v317, %v356
          %v373 = vadd.f32 %v318, %v357
          %v374 = vadd.f32 %v319, %v358
          %v375 = vadd.f32 %v320, %v359
          %v376 = vadd.f32 %v321, %v360
          %v377 = vadd.f32 %v322, %v361
          %v378 = vadd.f32 %v323, %v362
          %v379 = vadd.f32 %v324, %v363
          %s380 = sadd.s32 %s158, 4
          %s381 = ssub.s32 %s117, %s380
          %s382 = scalar_lea.vmem [#allocation2], %s381
          %v383 = vld [vmem:[%s382] sm:$0xff]
          %v384 = vld [vmem:[%s382 + $0x8] sm:$0xff]
          %v385 = vld [vmem:[%s382 + $0x10] sm:$0xff]
          %v386 = vld [vmem:[%s382 + $0x18] sm:$0xff]
          %v387 = vld [vmem:[%s382 + $0x20] sm:$0xff]
          %v388 = vld [vmem:[%s382 + $0x28] sm:$0xff]
          %v389 = vld [vmem:[%s382 + $0x30] sm:$0xff]
          %v390 = vld [vmem:[%s382 + $0x38] sm:$0xff]
          %v391 = vld [vmem:[%s382 + $0x40] sm:$0xff]
          %v392 = vld [vmem:[%s382 + $0x48] sm:$0xff]
          %v393 = vld [vmem:[%s382 + $0x50] sm:$0xff]
          %v394 = vld [vmem:[%s382 + $0x58] sm:$0xff]
          %v395 = vld [vmem:[%s382 + $0x60] sm:$0xff]
          %v396 = vld [vmem:[%s382 + $0x68] sm:$0xff]
          %v397 = vld [vmem:[%s382 + $0x70] sm:$0xff]
          %v398 = vld [vmem:[%s382 + $0x78] sm:$0xff]
          %v399 = vlaneseq
          %v400 = vshrl.u32 %v399, 7
          %v401 = vsub.s32 4, %v400
          %v402 = vrot.slane %v160, %v401
          %v403 = vmul.f32 %v383, %v402
          %v404 = vmul.f32 %v384, %v402
          %v405 = vmul.f32 %v385, %v402
          %v406 = vmul.f32 %v386, %v402
          %v407 = vmul.f32 %v387, %v402
          %v408 = vmul.f32 %v388, %v402
          %v409 = vmul.f32 %v389, %v402
          %v410 = vmul.f32 %v390, %v402
          %v411 = vmul.f32 %v391, %v402
          %v412 = vmul.f32 %v392, %v402
          %v413 = vmul.f32 %v393, %v402
          %v414 = vmul.f32 %v394, %v402
          %v415 = vmul.f32 %v395, %v402
          %v416 = vmul.f32 %v396, %v402
          %v417 = vmul.f32 %v397, %v402
          %v418 = vmul.f32 %v398, %v402
          %v419 = vadd.f32 %v364, %v403
          %v420 = vadd.f32 %v365, %v404
          %v421 = vadd.f32 %v366, %v405
          %v422 = vadd.f32 %v367, %v406
          %v423 = vadd.f32 %v368, %v407
          %v424 = vadd.f32 %v369, %v408
          %v425 = vadd.f32 %v370, %v409
          %v426 = vadd.f32 %v371, %v410
          %v427 = vadd.f32 %v372, %v411
          %v428 = vadd.f32 %v373, %v412
          %v429 = vadd.f32 %v374, %v413
          %v430 = vadd.f32 %v375, %v414
          %v431 = vadd.f32 %v376, %v415
          %v432 = vadd.f32 %v377, %v416
          %v433 = vadd.f32 %v378, %v417
          %v434 = vadd.f32 %v379, %v418
          %s435 = sadd.s32 %s158, 5
          %s436 = ssub.s32 %s117, %s435
          %s437 = scalar_lea.vmem [#allocation2], %s436
          %v438 = vld [vmem:[%s437] sm:$0xff]
          %v439 = vld [vmem:[%s437 + $0x8] sm:$0xff]
          %v440 = vld [vmem:[%s437 + $0x10] sm:$0xff]
          %v441 = vld [vmem:[%s437 + $0x18] sm:$0xff]
          %v442 = vld [vmem:[%s437 + $0x20] sm:$0xff]
          %v443 = vld [vmem:[%s437 + $0x28] sm:$0xff]
          %v444 = vld [vmem:[%s437 + $0x30] sm:$0xff]
          %v445 = vld [vmem:[%s437 + $0x38] sm:$0xff]
          %v446 = vld [vmem:[%s437 + $0x40] sm:$0xff]
          %v447 = vld [vmem:[%s437 + $0x48] sm:$0xff]
          %v448 = vld [vmem:[%s437 + $0x50] sm:$0xff]
          %v449 = vld [vmem:[%s437 + $0x58] sm:$0xff]
          %v450 = vld [vmem:[%s437 + $0x60] sm:$0xff]
          %v451 = vld [vmem:[%s437 + $0x68] sm:$0xff]
          %v452 = vld [vmem:[%s437 + $0x70] sm:$0xff]
          %v453 = vld [vmem:[%s437 + $0x78] sm:$0xff]
          %v454 = vlaneseq
          %v455 = vshrl.u32 %v454, 7
          %v456 = vsub.s32 5, %v455
          %v457 = vrot.slane %v160, %v456
          %v458 = vmul.f32 %v438, %v457
          %v459 = vmul.f32 %v439, %v457
          %v460 = vmul.f32 %v440, %v457
          %v461 = vmul.f32 %v441, %v457
          %v462 = vmul.f32 %v442, %v457
          %v463 = vmul.f32 %v443, %v457
          %v464 = vmul.f32 %v444, %v457
          %v465 = vmul.f32 %v445, %v457
          %v466 = vmul.f32 %v446, %v457
          %v467 = vmul.f32 %v447, %v457
          %v468 = vmul.f32 %v448, %v457
          %v469 = vmul.f32 %v449, %v457
          %v470 = vmul.f32 %v450, %v457
          %v471 = vmul.f32 %v451, %v457
          %v472 = vmul.f32 %v452, %v457
          %v473 = vmul.f32 %v453, %v457
          %v474 = vadd.f32 %v419, %v458
          %v475 = vadd.f32 %v420, %v459
          %v476 = vadd.f32 %v421, %v460
          %v477 = vadd.f32 %v422, %v461
          %v478 = vadd.f32 %v423, %v462
          %v479 = vadd.f32 %v424, %v463
          %v480 = vadd.f32 %v425, %v464
          %v481 = vadd.f32 %v426, %v465
          %v482 = vadd.f32 %v427, %v466
          %v483 = vadd.f32 %v428, %v467
          %v484 = vadd.f32 %v429, %v468
          %v485 = vadd.f32 %v430, %v469
          %v486 = vadd.f32 %v431, %v470
          %v487 = vadd.f32 %v432, %v471
          %v488 = vadd.f32 %v433, %v472
          %v489 = vadd.f32 %v434, %v473
          %s490 = sadd.s32 %s158, 6
          %s491 = ssub.s32 %s117, %s490
          %s492 = scalar_lea.vmem [#allocation2], %s491
          %v493 = vld [vmem:[%s492] sm:$0xff]
          %v494 = vld [vmem:[%s492 + $0x8] sm:$0xff]
          %v495 = vld [vmem:[%s492 + $0x10] sm:$0xff]
          %v496 = vld [vmem:[%s492 + $0x18] sm:$0xff]
          %v497 = vld [vmem:[%s492 + $0x20] sm:$0xff]
          %v498 = vld [vmem:[%s492 + $0x28] sm:$0xff]
          %v499 = vld [vmem:[%s492 + $0x30] sm:$0xff]
          %v500 = vld [vmem:[%s492 + $0x38] sm:$0xff]
          %v501 = vld [vmem:[%s492 + $0x40] sm:$0xff]
          %v502 = vld [vmem:[%s492 + $0x48] sm:$0xff]
          %v503 = vld [vmem:[%s492 + $0x50] sm:$0xff]
          %v504 = vld [vmem:[%s492 + $0x58] sm:$0xff]
          %v505 = vld [vmem:[%s492 + $0x60] sm:$0xff]
          %v506 = vld [vmem:[%s492 + $0x68] sm:$0xff]
          %v507 = vld [vmem:[%s492 + $0x70] sm:$0xff]
          %v508 = vld [vmem:[%s492 + $0x78] sm:$0xff]
          %v509 = vlaneseq
          %v510 = vshrl.u32 %v509, 7
          %v511 = vsub.s32 6, %v510
          %v512 = vrot.slane %v160, %v511
          %v513 = vmul.f32 %v493, %v512
          %v514 = vmul.f32 %v494, %v512
          %v515 = vmul.f32 %v495, %v512
          %v516 = vmul.f32 %v496, %v512
          %v517 = vmul.f32 %v497, %v512
          %v518 = vmul.f32 %v498, %v512
          %v519 = vmul.f32 %v499, %v512
          %v520 = vmul.f32 %v500, %v512
          %v521 = vmul.f32 %v501, %v512
          %v522 = vmul.f32 %v502, %v512
          %v523 = vmul.f32 %v503, %v512
          %v524 = vmul.f32 %v504, %v512
          %v525 = vmul.f32 %v505, %v512
          %v526 = vmul.f32 %v506, %v512
          %v527 = vmul.f32 %v507, %v512
          %v528 = vmul.f32 %v508, %v512
          %v529 = vadd.f32 %v474, %v513
          %v530 = vadd.f32 %v475, %v514
          %v531 = vadd.f32 %v476, %v515
          %v532 = vadd.f32 %v477, %v516
          %v533 = vadd.f32 %v478, %v517
          %v534 = vadd.f32 %v479, %v518
          %v535 = vadd.f32 %v480, %v519
          %v536 = vadd.f32 %v481, %v520
          %v537 = vadd.f32 %v482, %v521
          %v538 = vadd.f32 %v483, %v522
          %v539 = vadd.f32 %v484, %v523
          %v540 = vadd.f32 %v485, %v524
          %v541 = vadd.f32 %v486, %v525
          %v542 = vadd.f32 %v487, %v526
          %v543 = vadd.f32 %v488, %v527
          %v544 = vadd.f32 %v489, %v528
          %s545 = sadd.s32 %s158, 7
          %s546 = ssub.s32 %s117, %s545
          %s547 = scalar_lea.vmem [#allocation2], %s546
          %v548 = vld [vmem:[%s547] sm:$0xff]
          %v549 = vld [vmem:[%s547 + $0x8] sm:$0xff]
          %v550 = vld [vmem:[%s547 + $0x10] sm:$0xff]
          %v551 = vld [vmem:[%s547 + $0x18] sm:$0xff]
          %v552 = vld [vmem:[%s547 + $0x20] sm:$0xff]
          %v553 = vld [vmem:[%s547 + $0x28] sm:$0xff]
          %v554 = vld [vmem:[%s547 + $0x30] sm:$0xff]
          %v555 = vld [vmem:[%s547 + $0x38] sm:$0xff]
          %v556 = vld [vmem:[%s547 + $0x40] sm:$0xff]
          %v557 = vld [vmem:[%s547 + $0x48] sm:$0xff]
          %v558 = vld [vmem:[%s547 + $0x50] sm:$0xff]
          %v559 = vld [vmem:[%s547 + $0x58] sm:$0xff]
          %v560 = vld [vmem:[%s547 + $0x60] sm:$0xff]
          %v561 = vld [vmem:[%s547 + $0x68] sm:$0xff]
          %v562 = vld [vmem:[%s547 + $0x70] sm:$0xff]
          %v563 = vld [vmem:[%s547 + $0x78] sm:$0xff]
          %v564 = vlaneseq
          %v565 = vshrl.u32 %v564, 7
          %v566 = vsub.s32 7, %v565
          %v567 = vrot.slane %v160, %v566
          %v568 = vmul.f32 %v548, %v567
          %v569 = vmul.f32 %v549, %v567
          %v570 = vmul.f32 %v550, %v567
          %v571 = vmul.f32 %v551, %v567
          %v572 = vmul.f32 %v552, %v567
          %v573 = vmul.f32 %v553, %v567
          %v574 = vmul.f32 %v554, %v567
          %v575 = vmul.f32 %v555, %v567
          %v576 = vmul.f32 %v556, %v567
          %v577 = vmul.f32 %v557, %v567
          %v578 = vmul.f32 %v558, %v567
          %v579 = vmul.f32 %v559, %v567
          %v580 = vmul.f32 %v560, %v567
          %v581 = vmul.f32 %v561, %v567
          %v582 = vmul.f32 %v562, %v567
          %v583 = vmul.f32 %v563, %v567
          %v584 = vadd.f32 %v529, %v568
          %v585 = vadd.f32 %v530, %v569
          %v586 = vadd.f32 %v531, %v570
          %v587 = vadd.f32 %v532, %v571
          %v588 = vadd.f32 %v533, %v572
          %v589 = vadd.f32 %v534, %v573
          %v590 = vadd.f32 %v535, %v574
          %v591 = vadd.f32 %v536, %v575
          %v592 = vadd.f32 %v537, %v576
          %v593 = vadd.f32 %v538, %v577
          %v594 = vadd.f32 %v539, %v578
          %v595 = vadd.f32 %v540, %v579
          %v596 = vadd.f32 %v541, %v580
          %v597 = vadd.f32 %v542, %v581
          %v598 = vadd.f32 %v543, %v582
          %v599 = vadd.f32 %v544, %v583
        $region21: #{tpu_custom_call.1} parent=11 // loop_footer
          %s139 = sadd.s32 %s137, 1
        $region22: #{tpu_custom_call.1} parent=11 // loop_footer_branch
          %136 = sbr.rel target = $region18
        $region23: #{tpu_custom_call.1} parent=11 // loop_exit
          _
        %600 = vst [vmem:[%s67] sm:$0xff] %v142
        %601 = vst [vmem:[%s67 + $0x8] sm:$0xff] %v143
        %602 = vst [vmem:[%s67 + $0x10] sm:$0xff] %v144
        %603 = vst [vmem:[%s67 + $0x18] sm:$0xff] %v145
        %604 = vst [vmem:[%s67 + $0x20] sm:$0xff] %v146
        %605 = vst [vmem:[%s67 + $0x28] sm:$0xff] %v147
        %606 = vst [vmem:[%s67 + $0x30] sm:$0xff] %v148
        %607 = vst [vmem:[%s67 + $0x38] sm:$0xff] %v149
        %608 = vst [vmem:[%s67 + $0x40] sm:$0xff] %v150
        %609 = vst [vmem:[%s67 + $0x48] sm:$0xff] %v151
        %610 = vst [vmem:[%s67 + $0x50] sm:$0xff] %v152
        %611 = vst [vmem:[%s67 + $0x58] sm:$0xff] %v153
        %612 = vst [vmem:[%s67 + $0x60] sm:$0xff] %v154
        %613 = vst [vmem:[%s67 + $0x68] sm:$0xff] %v155
        %614 = vst [vmem:[%s67 + $0x70] sm:$0xff] %v156
        %615 = vst [vmem:[%s67 + $0x78] sm:$0xff] %v157
        %s616 = sand.u32 %s40, 1
        %s617 = scalar_lea.sflag [#allocation6], %s616
        %s618 = sand.u32 %s40, 1
        %s619 = smul.addr %s618, 128
        %s620 = scalar_lea.vmem [#allocation5], %s619
        // Predicated region
        $region24: #{tpu_custom_call.1} parent=11 // pred_check
          %p621 = pneg %p46
        $region25: #{tpu_custom_call.1} parent=11 // pred_check_branch
          %623 = sbr.rel (%p621) target = $region27
        $region26: #{tpu_custom_call.1} parent=11 // pred_region
          %s624 = smul.u32 16, %s19
          %s626 = ssub.s32 2048, 2048
          %627 = vsyncadd %s617, %s626
          %s628 = smul.addr %s624, 2
          %s629 = sadd.s32 %s18, %s628
          %s630 = smul.addr %s17, 64
          %s631 = sadd.s32 %s629, %s630
          %s632 = smul.addr %s631, 128
          %s633 = scalar_lea.hbm %s2, %s632
          %s634 = sshll.u32 %s620, 4
          %s635 = int_to_ptr.vmem [resolvable:$true] %s634
          %640 = dma.vmem_to_hbm [thread:$0]  %s635, 2048, %s633, %s617, 128, 256, 8
        $region27: #{tpu_custom_call.1} parent=11 // pred_fallthru
          _
      $region12: #{tpu_custom_call.1} parent=5 // pred_fallthru
        _
      %p641 = scmp.le.s32.totalorder 1, %s11
      // Predicated region
      $region28: #{tpu_custom_call.1} parent=5 // pred_check
        %p642 = pneg %p641
      $region29: #{tpu_custom_call.1} parent=5 // pred_check_branch
        %644 = sbr.rel (%p642) target = $region31
      $region30: #{tpu_custom_call.1} parent=5 // pred_region
        %s645 = ssub.s32 %s11, 1
        // Predicated region
        $region32: #{tpu_custom_call.1} parent=30 // pred_check
          %p646 = pneg %p52
        $region33: #{tpu_custom_call.1} parent=30 // pred_check_branch
          %648 = sbr.rel (%p646) target = $region35
        $region34: #{tpu_custom_call.1} parent=30 // pred_region
          %s649 = sand.u32 %s43, 1
          %s650 = scalar_lea.sflag [#allocation6], %s649
          %s651 = sand.u32 %s43, 1
          %s652 = smul.addr %s651, 128
          %s653 = scalar_lea.vmem [#allocation5], %s652
          %654 = dma.done %s650, 2048
        $region35: #{tpu_custom_call.1} parent=30 // pred_fallthru
          _
      $region31: #{tpu_custom_call.1} parent=5 // pred_fallthru
        _
    $region6: #{tpu_custom_call.1} parent=1 // loop_footer
      %s15 = sadd.s32 1, %s11
    $region7: #{tpu_custom_call.1} parent=1 // loop_footer_branch
      %10 = sbr.rel target = $region3
    $region8: #{tpu_custom_call.1} parent=1 // loop_exit
      _
    %655 = vsyncpa [#allocation6], 1
    %s656 = scalar_lea.sflag [#allocation6], 1
    %657 = vsyncpa %s656, 1
  %658 = vsyncmov [#allocation4]
  %s659 = vpop.sfrf %658
  %p660 = scmp.eq.s32.totalorder %s659, 0
  %p661 = pneg %p660
  %663 = shalt.err (%p661)
  %s664 = scalar_lea.sflag [#allocation4], 1
  %665 = vsyncmov %s664
  %s666 = vpop.sfrf %665
  %p667 = scmp.eq.s32.totalorder %s666, 0
  %p668 = pneg %p667
  %670 = shalt.err (%p668)

</llo_original>
